<compile_context>
chip_gen: v5e
topology: v5e:2x2
jax: 0.10.0
libtpu: 0.0.40
codegen_flags: <defaults>
</compile_context>

<pallas_src>
import math

import jax
import jax.numpy as jnp
from jax import lax
from jax.experimental import pallas as pl
from jax.experimental.pallas import tpu as pltpu


# ----------------------------------------------------------------------------
# Pallas kernel
#   grid = (BH // G, T // Tt)
#   inputs : taps (G, Tt, K),  x_pad (G, T+K-1, R)   [x zero-padded by P / K-1-P]
#   outputs: out  (G, Tt, R),  [optional] we (G, Tt, T)
# ----------------------------------------------------------------------------
def _make_dynconv_kernel(K, padding_l, T, Tt, emit_we):
    P = padding_l

    def kernel(w_ref, x_ref, out_ref, *we_refs):
        G = w_ref.shape[0]
        R = x_ref.shape[-1]
        t0 = pl.multiple_of(pl.program_id(1) * Tt, Tt)           # global row offset

        w = w_ref[...].astype(jnp.float32)                       # (G, Tt, K)

        # --- K-wide masked softmax over the taps -------------------------------
        # Tap k of (global) row t is on-band/in-sequence iff 0 <= t + k - P < T.
        t_loc = lax.broadcasted_iota(jnp.int32, (Tt, K), 0)
        k_loc = lax.broadcasted_iota(jnp.int32, (Tt, K), 1)
        s_pos = t0 + t_loc + k_loc - P                           # (Tt, K)
        valid = (s_pos >= 0) & (s_pos < T)

        logits = jnp.where(valid[None, :, :], w, -jnp.inf)
        m = jnp.max(logits, axis=-1, keepdims=True)
        e = jnp.exp(logits - m)
        denom = jnp.sum(e, axis=-1, keepdims=True)               # (G, Tt, 1)
        # EUP approximate reciprocal + one Newton step (keeps ~f32 accuracy
        # while keeping the divide off the VALU; denominator tensor is tiny).
        inv = pl.reciprocal(denom, approx=True)
        inv = inv * (2.0 - denom * inv)
        p = e * inv                                              # (G, Tt, K)

        # --- output: K-tap shifted multiply-accumulate over padded x -----------
        #   out[g, t, :] = sum_k p[g, t, k] * x[g, t + k - P, :]
        # x_ref is zero-padded so every slice is in-bounds; padded rows are
        # multiplied by exactly-zero probabilities.
        acc = jnp.zeros((G, Tt, R), jnp.float32)
        for k in range(K):                                       # K static & small
            xk = x_ref[:, pl.ds(t0 + k, Tt), :].astype(jnp.float32)
            acc = acc + p[:, :, k:k + 1] * xk
        out_ref[...] = acc.astype(out_ref.dtype)

        # --- optional weight_expanded scatter -----------------------------------
        if emit_we:
            we_ref = we_refs[0]
            # we[g, t, s] = p[g, t, s - t + P] on the band, 0 elsewhere
            # (softmax of -inf rows is 0 off-band, matching the reference).
            row = lax.broadcasted_iota(jnp.int32, (Tt, T), 0)
            col = lax.broadcasted_iota(jnp.int32, (Tt, T), 1)
            k_map = col - (t0 + row) + P                         # (Tt, T)
            band = jnp.zeros((G, Tt, T), jnp.float32)
            for k in range(K):
                band = jnp.where(k_map[None, :, :] == k, p[:, :, k:k + 1], band)
            we_ref[...] = band.astype(we_ref.dtype)

    return kernel


# ----------------------------------------------------------------------------
# Tiling / VMEM heuristics (generation-aware)
# ----------------------------------------------------------------------------
def _vmem_capacity_bytes():
    # 128 MiB on v5e/v6e, 64 MiB per TensorCore on v7x; conservative fallback.
    try:
        return int(pltpu.get_tpu_info().vmem_capacity_bytes)
    except Exception:
        return 64 << 20


def _num_tensorcores():
    try:
        return max(1, int(getattr(jax.devices()[0], "num_cores", 1)))
    except Exception:
        return 1


def _choose_tiles(BH, T, K, R, emit_we, budget, min_bh_steps):
    """Pick (G = bh rows per grid step, Tt = time rows per grid step)."""

    def bytes_per_bh(tt):
        b = 2 * tt * K                  # taps block (double buffered)
        b += 2 * (T + K - 1) * R        # padded-x block (double buffered)
        b += 2 * tt * R                 # out block (double buffered)
        b += 2 * tt * R + 6 * tt * K    # accumulator + softmax temporaries
        if emit_we:
            b += 2 * tt * T             # weight_expanded block (double buffered)
            b += 2 * tt * T             # scatter temporaries
        return 4 * b                    # conservative: f32 everywhere

    # Tt must be a multiple of 8 (sublane) or the full T.
    tt_cands = sorted({d for d in range(8, T + 1, 8) if T % d == 0} | {T},
                      reverse=True)
    best = None
    for tt in tt_cands:
        per = bytes_per_bh(tt)
        fits = [d for d in range(1, BH + 1) if BH % d == 0 and d * per <= budget]
        if not fits:
            continue
        # Keep >= min_bh_steps grid steps on the parallel axis only when it does
        # not prevent fitting (single-TC parts use min_bh_steps == 1).
        pref = [d for d in fits if BH // d >= min_bh_steps] or fits
        g = max(pref)
        if best is None or g * tt > best[0] * best[1]:
            best = (g, tt)
    if best is None:
        # Degrade gracefully instead of VMEM-OOM: smallest legal t-tile, G=1.
        return 1, min(tt_cands)
    return best


# ----------------------------------------------------------------------------
# pallas_call wrapper
# ----------------------------------------------------------------------------
def _dynamic_conv_pallas(taps_bh, x_bh, kernel_size, padding_l, need_weights):
    BH, T, K = taps_bh.shape
    _, _, R = x_bh.shape
    assert K == kernel_size
    assert 0 <= padding_l <= K - 1, "padding_l must lie inside the kernel window"
    dtype = x_bh.dtype

    # Zero-pad the time axis so every shifted K-tap slice is in-bounds.
    x_pad = jnp.pad(x_bh, ((0, 0), (padding_l, K - 1 - padding_l), (0, 0)))

    vmem = _vmem_capacity_bytes()
    budget = min(int(0.45 * vmem), 96 << 20)
    vmem_limit = int(min(max(int(0.70 * vmem), 32 << 20), 120 << 20))
    cores = _num_tensorcores()
    min_bh_steps = 2 * cores if cores > 1 else 1

    G, Tt = _choose_tiles(BH, T, K, R, need_weights, budget, min_bh_steps)
    grid = (BH // G, T // Tt)

    kernel = _make_dynconv_kernel(K, padding_l, T, Tt, need_weights)

    in_specs = [
        pl.BlockSpec((G, Tt, K), lambda g, t: (g, t, 0)),           # taps
        pl.BlockSpec((G, T + K - 1, R), lambda g, t: (g, 0, 0)),    # padded x
    ]
    out_spec_y = pl.BlockSpec((G, Tt, R), lambda g, t: (g, t, 0))
    if need_weights:
        out_shape = (
            jax.ShapeDtypeStruct((BH, T, R), dtype),
            jax.ShapeDtypeStruct((BH, T, T), dtype),   # activation dtype, not f32
        )
        out_specs = (out_spec_y,
                     pl.BlockSpec((G, Tt, T), lambda g, t: (g, t, 0)))
    else:
        out_shape = jax.ShapeDtypeStruct((BH, T, R), dtype)
        out_specs = out_spec_y

    result = pl.pallas_call(
        kernel,
        out_shape=out_shape,
        grid=grid,
        in_specs=in_specs,
        out_specs=out_specs,
        compiler_params=pltpu.CompilerParams(
            dimension_semantics=("parallel", "arbitrary"),
            vmem_limit_bytes=vmem_limit,
        ),
    )(taps_bh, x_pad)

    if need_weights:
        return result[0], result[1]
    return result, None


# ----------------------------------------------------------------------------
# Module wrappers (parameter init + forward glue)
# ----------------------------------------------------------------------------
class DynamicConv1dTBC:
    def __init__(self, input_size, kernel_size=1, padding_l=None, num_heads=1,
                 weight_dropout=0.0, bias=False, conv_bias=False, *, key):
        self.input_size = input_size
        self.kernel_size = kernel_size
        self.padding_l = padding_l
        self.num_heads = num_heads
        self.weight_dropout = weight_dropout

        # weight_linear: Linear(input_size -> num_heads * kernel_size),
        # xavier_uniform_: bound = sqrt(6 / (fan_in + fan_out))
        fan_in, fan_out = input_size, num_heads * kernel_size
        bound = math.sqrt(6.0 / (fan_in + fan_out))
        self.weight_linear_w = jax.random.uniform(
            key, (num_heads * kernel_size, input_size), jnp.float32, -bound, bound)
        self.weight_linear_b = (jnp.zeros((num_heads * kernel_size,), jnp.float32)
                                if bias else None)
        # conv_bias is never used in the reference forward(); kept for parity.
        self.conv_bias = jnp.zeros((input_size,), jnp.float32) if conv_bias else None

    def __call__(self, x):
        return self._forward(x, need_weights=True)

    def _forward(self, x, need_weights):
        T, B, C = x.shape
        K, H = self.kernel_size, self.num_heads
        R = C // H
        assert R * H == C == self.input_size

        # Dynamic per-position taps: (T, B, H*K)
        taps = jnp.einsum('tbc,oc->tbo', x, self.weight_linear_w)
        if self.weight_linear_b is not None:
            taps = taps + self.weight_linear_b

        # (T, B, H*K) -> (B*H, T, K) ; (T, B, C) -> (B*H, T, R)   (bh = b*H + h)
        taps_bh = jnp.transpose(taps.reshape(T, B * H, K), (1, 0, 2))
        x_bh = jnp.transpose(x.reshape(T, B * H, R), (1, 0, 2))

        out_bh, weight_expanded = _dynamic_conv_pallas(
            taps_bh, x_bh, K, self.padding_l, need_weights)

        output = jnp.transpose(out_bh, (1, 0, 2)).reshape(T, B, C)
        return output, weight_expanded


class DynamicConvConfig:
    def __init__(self, hidden_size, num_attention_heads, kernel_size,
                 attention_probs_dropout_prob=0.0, output_attentions=True,
                 use_glu=False):
        self.hidden_size = hidden_size
        self.num_attention_heads = num_attention_heads
        self.kernel_size = kernel_size
        self.attention_probs_dropout_prob = attention_probs_dropout_prob
        self.output_attentions = output_attentions
        self.use_glu = use_glu


class DynamicConv(DynamicConv1dTBC):
    def __init__(self, config, *, key):
        kernel_size = config.kernel_size
        # TODO(synk): even kernel sizes use a (left,right) padding tuple in the
        # reference; only the odd / single-int padding path is implemented.
        assert kernel_size % 2 == 1, "only odd kernel sizes supported"
        padding_l = kernel_size // 2

        k_core, k_proj = jax.random.split(key)
        super().__init__(input_size=config.hidden_size, kernel_size=kernel_size,
                         padding_l=padding_l,
                         num_heads=config.num_attention_heads,
                         weight_dropout=config.attention_probs_dropout_prob,
                         bias=False, conv_bias=False, key=k_core)
        self.output_attentions = config.output_attentions
        self.use_glu = config.use_glu

        C = config.hidden_size
        out_dim = 2 * C if config.use_glu else C
        bound = 1.0 / math.sqrt(C)     # PyTorch nn.Linear default init bound
        kw, kb = jax.random.split(k_proj)
        self.proj_w = jax.random.uniform(kw, (out_dim, C), jnp.float32, -bound, bound)
        self.proj_b = jax.random.uniform(kb, (out_dim,), jnp.float32, -bound, bound)

    def __call__(self, hidden_states, attention_mask=None, head_mask=None):
        # attention_mask / head_mask are accepted but unused (as in the reference).
        h = jnp.einsum('tbc,oc->tbo', hidden_states, self.proj_w) + self.proj_b
        if self.use_glu:
            a, b = jnp.split(h, 2, axis=-1)
            h = a * jax.nn.sigmoid(b)
        # Skip emitting the (B*H, T, T) weights entirely when they are unused.
        context_layer, attention_probs = self._forward(
            h, need_weights=self.output_attentions)
        if self.output_attentions:
            return context_layer, attention_probs
        return (context_layer,)


# ----------------------------------------------------------------------------
# Pure-JAX reference (no Pallas) for a correctness check
# ----------------------------------------------------------------------------
def _reference_dynamic_conv(x, w_lin, b_lin, K, P, H):
    T, B, C = x.shape
    R = C // H
    taps = jnp.einsum('tbc,oc->tbo', x, w_lin)
    if b_lin is not None:
        taps = taps + b_lin
    taps_bh = jnp.transpose(taps.reshape(T, B * H, K), (1, 0, 2))   # (BH,T,K)
    x_bh = jnp.transpose(x.reshape(T, B * H, R), (1, 0, 2))         # (BH,T,R)

    t = jnp.arange(T)[:, None]
    s = jnp.arange(T)[None, :]
    kk = s - t + P
    valid = (kk >= 0) & (kk < K)
    idx = jnp.broadcast_to(jnp.clip(kk, 0, K - 1)[None], (B * H, T, T))
    logits = jnp.take_along_axis(taps_bh, idx, axis=2)
    logits = jnp.where(valid[None], logits, -jnp.inf)
    we = jax.nn.softmax(logits, axis=-1)                            # (BH,T,T)
    out = jnp.einsum('bts,bsr->btr', we, x_bh)
    out = jnp.transpose(out, (1, 0, 2)).reshape(T, B, C)
    return out, we


if __name__ == "__main__":
    # Small, module-consistent shapes: seq=8, batch=2, hidden=32, heads=4, K=3.
    T, B = 8, 2
    hidden_size, num_heads, kernel_size = 32, 4, 3

    cfg = DynamicConvConfig(
        hidden_size=hidden_size,
        num_attention_heads=num_heads,
        kernel_size=kernel_size,
        attention_probs_dropout_prob=0.0,
        output_attentions=True,
        use_glu=False,
    )

    key = jax.random.PRNGKey(0)
    k_mod, k_x = jax.random.split(key)

    conv = DynamicConv(cfg, key=k_mod)
    hidden_states = jax.random.normal(k_x, (T, B, hidden_size), jnp.float32)

    context_layer, attention_probs = conv(hidden_states)
    context_layer = jax.block_until_ready(context_layer)
    attention_probs = jax.block_until_ready(attention_probs)

    # Also exercise the "weights not emitted" fast path (output_attentions=False).
    cfg_no_attn = DynamicConvConfig(
        hidden_size=hidden_size, num_attention_heads=num_heads,
        kernel_size=kernel_size, attention_probs_dropout_prob=0.0,
        output_attentions=False, use_glu=False)
    conv_no_attn = DynamicConv(cfg_no_attn, key=k_mod)   # identical params
    (ctx_only,) = conv_no_attn(hidden_states)
    ctx_only = jax.block_until_ready(ctx_only)

    # Reference: same input projection, then the pure-JAX dynamic conv.
    h_ref = jnp.einsum('tbc,oc->tbo', hidden_states, conv.proj_w) + conv.proj_b
    ref_out, ref_we = _reference_dynamic_conv(
        h_ref, conv.weight_linear_w, conv.weight_linear_b,
        kernel_size, conv.padding_l, num_heads)

    assert context_layer.shape == (T, B, hidden_size)
    assert attention_probs.shape == (B * num_heads, T, T)
    # Tolerances account for the EUP approx-reciprocal (+1 Newton step) softmax.
    assert jnp.allclose(jnp.sum(attention_probs, axis=-1), 1.0, atol=1e-4)
    assert jnp.allclose(attention_probs, ref_we, atol=2e-4, rtol=2e-4)
    assert jnp.allclose(context_layer, ref_out, atol=5e-4, rtol=5e-4)
    assert jnp.allclose(ctx_only, context_layer, atol=1e-5, rtol=1e-5)

    print("KERNEL_OK")
</pallas_src>

<mosaic_0001>
module attributes {stable_mosaic.version = 11 : i64} {
  func.func @kernel(%arg0: i32, %arg1: i32, %arg2: memref<8x8x3xf32, #tpu.memory_space<vmem>>, %arg3: memref<8x10x8xf32, #tpu.memory_space<vmem>>, %arg4: memref<8x8x8xf32, #tpu.memory_space<vmem>>, %arg5: memref<8x8x8xf32, #tpu.memory_space<vmem>>) attributes {dimension_semantics = [#tpu.dimension_semantics<parallel>, #tpu.dimension_semantics<arbitrary>], iteration_bounds = array<i64: 1, 1>, scalar_prefetch = 0 : i64, scratch_operands = 0 : i64, tpu.core_type = #tpu.core_type<tc>, window_params = [{transform_indices = @transform_0, window_bounds = array<i64: 8, 8, 3>}, {transform_indices = @transform_1, window_bounds = array<i64: 8, 10, 8>}, {transform_indices = @transform_2, window_bounds = array<i64: 8, 8, 8>}, {transform_indices = @transform_3, window_bounds = array<i64: 8, 8, 8>}]} {
    %c8_i32 = arith.constant 8 : i32
    %0 = arith.muli %arg1, %c8_i32 : i32
    %1 = tpu.assume_multiple %0, 8 : i32
    %c0 = arith.constant 0 : index
    %c0_0 = arith.constant 0 : index
    %c0_1 = arith.constant 0 : index
    %2 = vector.load %arg2[%c0, %c0_0, %c0_1] : memref<8x8x3xf32, #tpu.memory_space<vmem>>, vector<8x8x3xf32>
    %3 = tpu.iota {dimensions = array<i32: 0>} : vector<8x3xi32>
    %4 = tpu.iota {dimensions = array<i32: 1>} : vector<8x3xi32>
    %5 = vector.broadcast %1 : i32 to vector<8x3xi32>
    %6 = arith.addi %5, %3 : vector<8x3xi32>
    %7 = arith.addi %6, %4 : vector<8x3xi32>
    %c1_i32 = arith.constant 1 : i32
    %8 = vector.broadcast %c1_i32 : i32 to vector<8x3xi32>
    %9 = arith.subi %7, %8 : vector<8x3xi32>
    %c0_i32 = arith.constant 0 : i32
    %10 = vector.broadcast %c0_i32 : i32 to vector<8x3xi32>
    %11 = arith.cmpi sge, %9, %10 : vector<8x3xi32>
    %c8_i32_2 = arith.constant 8 : i32
    %12 = vector.broadcast %c8_i32_2 : i32 to vector<8x3xi32>
    %13 = arith.cmpi slt, %9, %12 : vector<8x3xi32>
    %14 = arith.andi %11, %13 : vector<8x3xi1>
    %15 = vector.shape_cast %14 : vector<8x3xi1> to vector<1x8x3xi1>
    %cst = arith.constant 0xFF800000 : f32
    %16 = vector.shape_cast %15 : vector<1x8x3xi1> to vector<1x8x3xi1>
    %17 = vector.broadcast %16 : vector<1x8x3xi1> to vector<8x8x3xi1>
    %18 = vector.broadcast %cst : f32 to vector<8x8x3xf32>
    %19 = arith.select %17, %2, %18 : vector<8x8x3xi1>, vector<8x8x3xf32>
    %cst_3 = arith.constant dense<0xFF800000> : vector<8x8xf32>
    %20 = vector.multi_reduction <maximumf>, %19, %cst_3 [2] : vector<8x8x3xf32> to vector<8x8xf32>
    %21 = vector.shape_cast %20 : vector<8x8xf32> to vector<8x8x1xf32>
    %22 = vector.broadcast %21 : vector<8x8x1xf32> to vector<8x8x3xf32>
    %23 = arith.subf %19, %22 : vector<8x8x3xf32>
    %24 = math.exp %23 : vector<8x8x3xf32>
    %cst_4 = arith.constant dense<0.000000e+00> : vector<8x8xf32>
    %25 = vector.multi_reduction <add>, %24, %cst_4 [2] : vector<8x8x3xf32> to vector<8x8xf32>
    %26 = vector.shape_cast %25 : vector<8x8xf32> to vector<8x8x1xf32>
    %27 = tpu.reciprocal %26 {approx = true} : vector<8x8x1xf32> -> vector<8x8x1xf32>
    %28 = arith.mulf %26, %27 : vector<8x8x1xf32>
    %cst_5 = arith.constant 2.000000e+00 : f32
    %29 = vector.broadcast %cst_5 : f32 to vector<8x8x1xf32>
    %30 = arith.subf %29, %28 : vector<8x8x1xf32>
    %31 = arith.mulf %27, %30 : vector<8x8x1xf32>
    %32 = vector.broadcast %31 : vector<8x8x1xf32> to vector<8x8x3xf32>
    %33 = arith.mulf %24, %32 : vector<8x8x3xf32>
    %cst_6 = arith.constant 0.000000e+00 : f32
    %34 = vector.broadcast %cst_6 : f32 to vector<8x8x8xf32>
    %c0_i32_7 = arith.constant 0 : i32
    %35 = arith.addi %1, %c0_i32_7 : i32
    %c0_8 = arith.constant 0 : index
    %36 = arith.index_cast %35 : i32 to index
    %c0_9 = arith.constant 0 : index
    %37 = vector.load %arg3[%c0_8, %36, %c0_9] : memref<8x10x8xf32, #tpu.memory_space<vmem>>, vector<8x8x8xf32>
    %38 = vector.extract_strided_slice %33 {offsets = [0, 0, 0], sizes = [8, 8, 1], strides = [1, 1, 1]} : vector<8x8x3xf32> to vector<8x8x1xf32>
    %39 = vector.broadcast %38 : vector<8x8x1xf32> to vector<8x8x8xf32>
    %40 = arith.mulf %39, %37 : vector<8x8x8xf32>
    %41 = arith.addf %34, %40 : vector<8x8x8xf32>
    %c1_i32_10 = arith.constant 1 : i32
    %42 = arith.addi %1, %c1_i32_10 : i32
    %c0_11 = arith.constant 0 : index
    %43 = arith.index_cast %42 : i32 to index
    %c0_12 = arith.constant 0 : index
    %44 = vector.load %arg3[%c0_11, %43, %c0_12] : memref<8x10x8xf32, #tpu.memory_space<vmem>>, vector<8x8x8xf32>
    %45 = vector.extract_strided_slice %33 {offsets = [0, 0, 1], sizes = [8, 8, 1], strides = [1, 1, 1]} : vector<8x8x3xf32> to vector<8x8x1xf32>
    %46 = vector.broadcast %45 : vector<8x8x1xf32> to vector<8x8x8xf32>
    %47 = arith.mulf %46, %44 : vector<8x8x8xf32>
    %48 = arith.addf %41, %47 : vector<8x8x8xf32>
    %c2_i32 = arith.constant 2 : i32
    %49 = arith.addi %1, %c2_i32 : i32
    %c0_13 = arith.constant 0 : index
    %50 = arith.index_cast %49 : i32 to index
    %c0_14 = arith.constant 0 : index
    %51 = vector.load %arg3[%c0_13, %50, %c0_14] : memref<8x10x8xf32, #tpu.memory_space<vmem>>, vector<8x8x8xf32>
    %52 = vector.extract_strided_slice %33 {offsets = [0, 0, 2], sizes = [8, 8, 1], strides = [1, 1, 1]} : vector<8x8x3xf32> to vector<8x8x1xf32>
    %53 = vector.broadcast %52 : vector<8x8x1xf32> to vector<8x8x8xf32>
    %54 = arith.mulf %53, %51 : vector<8x8x8xf32>
    %55 = arith.addf %48, %54 : vector<8x8x8xf32>
    %c0_15 = arith.constant 0 : index
    %c0_16 = arith.constant 0 : index
    %c0_17 = arith.constant 0 : index
    %56 = vector.load %arg4[%c0_15, %c0_16, %c0_17] : memref<8x8x8xf32, #tpu.memory_space<vmem>>, vector<8x8x8xf32>
    tpu.vector_store %arg4[%c0_15, %c0_16, %c0_17], %55 {strides = array<i32>} : memref<8x8x8xf32, #tpu.memory_space<vmem>>, vector<8x8x8xf32>,
    %57 = tpu.iota {dimensions = array<i32: 0>} : vector<8x8xi32>
    %58 = tpu.iota {dimensions = array<i32: 1>} : vector<8x8xi32>
    %59 = vector.broadcast %1 : i32 to vector<8x8xi32>
    %60 = arith.addi %59, %57 : vector<8x8xi32>
    %61 = arith.subi %58, %60 : vector<8x8xi32>
    %c1_i32_18 = arith.constant 1 : i32
    %62 = vector.broadcast %c1_i32_18 : i32 to vector<8x8xi32>
    %63 = arith.addi %61, %62 : vector<8x8xi32>
    %cst_19 = arith.constant 0.000000e+00 : f32
    %64 = vector.broadcast %cst_19 : f32 to vector<8x8x8xf32>
    %65 = vector.shape_cast %63 : vector<8x8xi32> to vector<1x8x8xi32>
    %c0_i32_20 = arith.constant 0 : i32
    %66 = vector.broadcast %c0_i32_20 : i32 to vector<1x8x8xi32>
    %67 = arith.cmpi eq, %65, %66 : vector<1x8x8xi32>
    %68 = vector.extract_strided_slice %33 {offsets = [0, 0, 0], sizes = [8, 8, 1], strides = [1, 1, 1]} : vector<8x8x3xf32> to vector<8x8x1xf32>
    %69 = vector.shape_cast %67 : vector<1x8x8xi1> to vector<1x8x8xi1>
    %70 = vector.broadcast %69 : vector<1x8x8xi1> to vector<8x8x8xi1>
    %71 = vector.shape_cast %68 : vector<8x8x1xf32> to vector<8x8x1xf32>
    %72 = vector.broadcast %71 : vector<8x8x1xf32> to vector<8x8x8xf32>
    %73 = arith.select %70, %72, %64 : vector<8x8x8xi1>, vector<8x8x8xf32>
    %74 = vector.shape_cast %63 : vector<8x8xi32> to vector<1x8x8xi32>
    %c1_i32_21 = arith.constant 1 : i32
    %75 = vector.broadcast %c1_i32_21 : i32 to vector<1x8x8xi32>
    %76 = arith.cmpi eq, %74, %75 : vector<1x8x8xi32>
    %77 = vector.extract_strided_slice %33 {offsets = [0, 0, 1], sizes = [8, 8, 1], strides = [1, 1, 1]} : vector<8x8x3xf32> to vector<8x8x1xf32>
    %78 = vector.shape_cast %76 : vector<1x8x8xi1> to vector<1x8x8xi1>
    %79 = vector.broadcast %78 : vector<1x8x8xi1> to vector<8x8x8xi1>
    %80 = vector.shape_cast %77 : vector<8x8x1xf32> to vector<8x8x1xf32>
    %81 = vector.broadcast %80 : vector<8x8x1xf32> to vector<8x8x8xf32>
    %82 = arith.select %79, %81, %73 : vector<8x8x8xi1>, vector<8x8x8xf32>
    %83 = vector.shape_cast %63 : vector<8x8xi32> to vector<1x8x8xi32>
    %c2_i32_22 = arith.constant 2 : i32
    %84 = vector.broadcast %c2_i32_22 : i32 to vector<1x8x8xi32>
    %85 = arith.cmpi eq, %83, %84 : vector<1x8x8xi32>
    %86 = vector.extract_strided_slice %33 {offsets = [0, 0, 2], sizes = [8, 8, 1], strides = [1, 1, 1]} : vector<8x8x3xf32> to vector<8x8x1xf32>
    %87 = vector.shape_cast %85 : vector<1x8x8xi1> to vector<1x8x8xi1>
    %88 = vector.broadcast %87 : vector<1x8x8xi1> to vector<8x8x8xi1>
    %89 = vector.shape_cast %86 : vector<8x8x1xf32> to vector<8x8x1xf32>
    %90 = vector.broadcast %89 : vector<8x8x1xf32> to vector<8x8x8xf32>
    %91 = arith.select %88, %90, %82 : vector<8x8x8xi1>, vector<8x8x8xf32>
    %c0_23 = arith.constant 0 : index
    %c0_24 = arith.constant 0 : index
    %c0_25 = arith.constant 0 : index
    %92 = vector.load %arg5[%c0_23, %c0_24, %c0_25] : memref<8x8x8xf32, #tpu.memory_space<vmem>>, vector<8x8x8xf32>
    tpu.vector_store %arg5[%c0_23, %c0_24, %c0_25], %91 {strides = array<i32>} : memref<8x8x8xf32, #tpu.memory_space<vmem>>, vector<8x8x8xf32>,
    return
  }
  func.func @transform_0(%arg0: i32, %arg1: i32) -> (i32, i32, i32) {
    %c0_i32 = arith.constant 0 : i32
    %c0_i32_0 = arith.constant 0 : i32
    return %arg0, %arg1, %c0_i32 : i32, i32, i32
  }
  func.func @transform_1(%arg0: i32, %arg1: i32) -> (i32, i32, i32) {
    %c0_i32 = arith.constant 0 : i32
    %c0_i32_0 = arith.constant 0 : i32
    %c0_i32_1 = arith.constant 0 : i32
    return %arg0, %c0_i32, %c0_i32_0 : i32, i32, i32
  }
  func.func @transform_2(%arg0: i32, %arg1: i32) -> (i32, i32, i32) {
    %c0_i32 = arith.constant 0 : i32
    %c0_i32_0 = arith.constant 0 : i32
    return %arg0, %arg1, %c0_i32 : i32, i32, i32
  }
  func.func @transform_3(%arg0: i32, %arg1: i32) -> (i32, i32, i32) {
    %c0_i32 = arith.constant 0 : i32
    %c0_i32_0 = arith.constant 0 : i32
    return %arg0, %arg1, %c0_i32 : i32, i32, i32
  }
}

</mosaic_0001>

<llo_original>
// kernel: tpu_custom_call.1
$region0: #{tpu_custom_call.1}
  #allocation0 [shape = 'u32[]', space=smem, size = 0x4, offset = 0x4, fixed_abs, tag = 'smem constant byte address 0x4 - core index']
  #allocation1 [shape = 'u32[72,128]{1,0:T(1,128)}', space=vmem, size = 0x9000, scoped, tag = 'internal scratch']
  %s0 = inlined_call_operand.vmem [shape: f32[8,8,3], index: 0, kind: input, shape index: {}]
  %s1 = inlined_call_operand.vmem [shape: f32[8,10,8], index: 1, kind: input, shape index: {}]
  %s2 = inlined_call_operand.hbm [shape: f32[8,8,8], index: 2, kind: output, shape index: {0}]
  %s3 = inlined_call_operand.hbm [shape: f32[8,8,8], index: 3, kind: output, shape index: {1}]
  %4 = xla_tuple %s2, %s3
  %s5 = sld [smem:[#allocation0]]
  $region26: #{tpu_custom_call.1} parent=0
    _
  %s7 = ssub.s32 1, %s5
  %s8 = scalar_select 0, %s7, %s5
  $region1: #{tpu_custom_call.1} parent=0
    #allocation2 [shape = 'u8[32768]{0}', space=vmem, size = 0x8000, scoped, tag = 'output window, operand 0, single buffered']
    #allocation3 [shape = 's32[1]{0}', space=sflag, size = 0x4, scoped, tag = 'scoped memory for tpu_custom_call.1']
    #allocation4 [shape = 'u8[32768]{0}', space=vmem, size = 0x8000, scoped, tag = 'output window, operand 1, single buffered']
    #allocation5 [shape = 's32[1]{0}', space=sflag, size = 0x4, scoped, tag = 'scoped memory for tpu_custom_call.1']
    %9 = vsyncpa [#allocation3], 0
    %10 = vsyncpa [#allocation5], 0
    // Predicated region
    $region2: #{tpu_custom_call.1} parent=1 // pred_check
      _
    $region3: #{tpu_custom_call.1} parent=1 // pred_check_branch
      %12 = sbr.rel (0) target = $region5
    $region4: #{tpu_custom_call.1} parent=1 // pred_region
      _
    $region5: #{tpu_custom_call.1} parent=1 // pred_fallthru
      _
    // Predicated region
    $region6: #{tpu_custom_call.1} parent=1 // pred_check
      _
    $region7: #{tpu_custom_call.1} parent=1 // pred_check_branch
      %14 = sbr.rel (0) target = $region9
    $region8: #{tpu_custom_call.1} parent=1 // pred_region
      _
    $region9: #{tpu_custom_call.1} parent=1 // pred_fallthru
      _
    %s15 = smul.u32 0, 8
    %v16 = vld [vmem:[%s0] sm:$0xff]
    %v17 = vld [vmem:[%s0 + $0x8] sm:$0xff]
    %v18 = vld [vmem:[%s0 + $0x10] sm:$0xff]
    %v19 = vld [vmem:[%s0 + $0x18] sm:$0xff]
    %v20 = vld [vmem:[%s0 + $0x20] sm:$0xff]
    %v21 = vld [vmem:[%s0 + $0x28] sm:$0xff]
    %v22 = vld [vmem:[%s0 + $0x30] sm:$0xff]
    %v23 = vld [vmem:[%s0 + $0x38] sm:$0xff]
    %v24 = vlaneseq
    %v25 = vshrl.u32 %v24, 7
    %v26 = vlaneseq
    %v27 = vand.u32 %v26, 127
    %v28 = vstv %s15
    %v29 = vadd.s32 %v28, %v25
    %v30 = vadd.s32 %v29, %v27
    %v31 = vsub.s32 %v30, 1
    %vm32 = vcmp.ge.s32.totalorder %v31, 0
    %vm33 = vcmp.lt.s32.totalorder %v31, 8
    %vm34 = vmand %vm32, %vm33
    %v35 = vsel %vm34, 1, 0
    %vm36 = vcmp.eq.s32.totalorder %v35, 1
    %v37 = vsel %vm36, %v16, -inf
    %v38 = vsel %vm36, %v17, -inf
    %v39 = vsel %vm36, %v18, -inf
    %v40 = vsel %vm36, %v19, -inf
    %v41 = vsel %vm36, %v20, -inf
    %v42 = vsel %vm36, %v21, -inf
    %v43 = vsel %vm36, %v22, -inf
    %v44 = vsel %vm36, %v23, -inf
    %vm45 = vcmask 23552
    %v46 = vsel %vm45, %v37, -inf
    %47 = vmax.xlane.f32.xlu0 %v46
    %v48 = vpop.xlane.xlu0 %47
    %v49 = vsel %vm45, %v38, -inf
    %50 = vmax.xlane.f32.xlu0 %v49
    %v51 = vpop.xlane.xlu0 %50
    %v52 = vsel %vm45, %v39, -inf
    %53 = vmax.xlane.f32.xlu0 %v52
    %v54 = vpop.xlane.xlu0 %53
    %v55 = vsel %vm45, %v40, -inf
    %56 = vmax.xlane.f32.xlu0 %v55
    %v57 = vpop.xlane.xlu0 %56
    %v58 = vsel %vm45, %v41, -inf
    %59 = vmax.xlane.f32.xlu0 %v58
    %v60 = vpop.xlane.xlu0 %59
    %v61 = vsel %vm45, %v42, -inf
    %62 = vmax.xlane.f32.xlu0 %v61
    %v63 = vpop.xlane.xlu0 %62
    %v64 = vsel %vm45, %v43, -inf
    %65 = vmax.xlane.f32.xlu0 %v64
    %v66 = vpop.xlane.xlu0 %65
    %v67 = vsel %vm45, %v44, -inf
    %68 = vmax.xlane.f32.xlu0 %v67
    %v69 = vpop.xlane.xlu0 %68
    %v70 = vsub.f32 %v37, %v48
    %v71 = vsub.f32 %v38, %v51
    %v72 = vsub.f32 %v39, %v54
    %v73 = vsub.f32 %v40, %v57
    %v74 = vsub.f32 %v41, %v60
    %v75 = vsub.f32 %v42, %v63
    %v76 = vsub.f32 %v43, %v66
    %v77 = vsub.f32 %v44, %v69
    %v78 = vmul.f32 %v70, 1.442695
    %v79 = vpow.pop %v78
    %v80 = vmul.f32 %v71, 1.442695
    %v81 = vpow.pop %v80
    %v82 = vmul.f32 %v72, 1.442695
    %v83 = vpow.pop %v82
    %v84 = vmul.f32 %v73, 1.442695
    %v85 = vpow.pop %v84
    %v86 = vmul.f32 %v74, 1.442695
    %v87 = vpow.pop %v86
    %v88 = vmul.f32 %v75, 1.442695
    %v89 = vpow.pop %v88
    %v90 = vmul.f32 %v76, 1.442695
    %v91 = vpow.pop %v90
    %v92 = vmul.f32 %v77, 1.442695
    %v93 = vpow.pop %v92
    %v94 = vsel %vm45, %v79, 0.0
    %95 = vadd.xlane.f32.xlu0 %v94
    %v96 = vpop.xlane.xlu0 %95
    %v97 = vsel %vm45, %v81, 0.0
    %98 = vadd.xlane.f32.xlu0 %v97
    %v99 = vpop.xlane.xlu0 %98
    %v100 = vsel %vm45, %v83, 0.0
    %101 = vadd.xlane.f32.xlu0 %v100
    %v102 = vpop.xlane.xlu0 %101
    %v103 = vsel %vm45, %v85, 0.0
    %104 = vadd.xlane.f32.xlu0 %v103
    %v105 = vpop.xlane.xlu0 %104
    %v106 = vsel %vm45, %v87, 0.0
    %107 = vadd.xlane.f32.xlu0 %v106
    %v108 = vpop.xlane.xlu0 %107
    %v109 = vsel %vm45, %v89, 0.0
    %110 = vadd.xlane.f32.xlu0 %v109
    %v111 = vpop.xlane.xlu0 %110
    %v112 = vsel %vm45, %v91, 0.0
    %113 = vadd.xlane.f32.xlu0 %v112
    %v114 = vpop.xlane.xlu0 %113
    %v115 = vsel %vm45, %v93, 0.0
    %116 = vadd.xlane.f32.xlu0 %v115
    %v117 = vpop.xlane.xlu0 %116
    %v118 = vrcp.pop %v96
    %v119 = vrcp.pop %v99
    %v120 = vrcp.pop %v102
    %v121 = vrcp.pop %v105
    %v122 = vrcp.pop %v108
    %v123 = vrcp.pop %v111
    %v124 = vrcp.pop %v114
    %v125 = vrcp.pop %v117
    %v126 = vmul.f32 %v96, %v118
    %v127 = vmul.f32 %v99, %v119
    %v128 = vmul.f32 %v102, %v120
    %v129 = vmul.f32 %v105, %v121
    %v130 = vmul.f32 %v108, %v122
    %v131 = vmul.f32 %v111, %v123
    %v132 = vmul.f32 %v114, %v124
    %v133 = vmul.f32 %v117, %v125
    %v134 = vsub.f32 2.0, %v126
    %v135 = vsub.f32 2.0, %v127
    %v136 = vsub.f32 2.0, %v128
    %v137 = vsub.f32 2.0, %v129
    %v138 = vsub.f32 2.0, %v130
    %v139 = vsub.f32 2.0, %v131
    %v140 = vsub.f32 2.0, %v132
    %v141 = vsub.f32 2.0, %v133
    %v142 = vmul.f32 %v118, %v134
    %v143 = vmul.f32 %v119, %v135
    %v144 = vmul.f32 %v120, %v136
    %v145 = vmul.f32 %v121, %v137
    %v146 = vmul.f32 %v122, %v138
    %v147 = vmul.f32 %v123, %v139
    %v148 = vmul.f32 %v124, %v140
    %v149 = vmul.f32 %v125, %v141
    %v150 = vmul.f32 %v79, %v142
    %v151 = vmul.f32 %v81, %v143
    %v152 = vmul.f32 %v83, %v144
    %v153 = vmul.f32 %v85, %v145
    %v154 = vmul.f32 %v87, %v146
    %v155 = vmul.f32 %v89, %v147
    %v156 = vmul.f32 %v91, %v148
    %v157 = vmul.f32 %v93, %v149
    %s158 = scalar_lea.vmem %s1, %s15
    %v159 = vld [vmem:[%s158] sm:$0xff]
    %v160 = vld [vmem:[%s158 + $0x10] sm:$0xff]
    %v161 = vld [vmem:[%s158 + $0x20] sm:$0xff]
    %v162 = vld [vmem:[%s158 + $0x30] sm:$0xff]
    %v163 = vld [vmem:[%s158 + $0x40] sm:$0xff]
    %v164 = vld [vmem:[%s158 + $0x50] sm:$0xff]
    %v165 = vld [vmem:[%s158 + $0x60] sm:$0xff]
    %v166 = vld [vmem:[%s158 + $0x70] sm:$0xff]
    %168 = vset.pattern.permute.xlu0 0
    %169 = vperm.xlu0 %168, %v150
    %v170 = vpop.permute.xlu0 %169
    %173 = vset.pattern.permute.xlu0 0
    %174 = vperm.xlu0 %173, %v151
    %v175 = vpop.permute.xlu0 %174
    %178 = vset.pattern.permute.xlu0 0
    %179 = vperm.xlu0 %178, %v152
    %v180 = vpop.permute.xlu0 %179
    %183 = vset.pattern.permute.xlu0 0
    %184 = vperm.xlu0 %183, %v153
    %v185 = vpop.permute.xlu0 %184
    %188 = vset.pattern.permute.xlu0 0
    %189 = vperm.xlu0 %188, %v154
    %v190 = vpop.permute.xlu0 %189
    %193 = vset.pattern.permute.xlu0 0
    %194 = vperm.xlu0 %193, %v155
    %v195 = vpop.permute.xlu0 %194
    %198 = vset.pattern.permute.xlu0 0
    %199 = vperm.xlu0 %198, %v156
    %v200 = vpop.permute.xlu0 %199
    %203 = vset.pattern.permute.xlu0 0
    %204 = vperm.xlu0 %203, %v157
    %v205 = vpop.permute.xlu0 %204
    %v207 = vmul.f32 %v170, %v159
    %v208 = vmul.f32 %v175, %v160
    %v209 = vmul.f32 %v180, %v161
    %v210 = vmul.f32 %v185, %v162
    %v211 = vmul.f32 %v190, %v163
    %v212 = vmul.f32 %v195, %v164
    %v213 = vmul.f32 %v200, %v165
    %v214 = vmul.f32 %v205, %v166
    %v215 = vadd.f32 %v207, 0.0
    %v216 = vadd.f32 %v208, 0.0
    %v217 = vadd.f32 %v209, 0.0
    %v218 = vadd.f32 %v210, 0.0
    %v219 = vadd.f32 %v211, 0.0
    %v220 = vadd.f32 %v212, 0.0
    %v221 = vadd.f32 %v213, 0.0
    %v222 = vadd.f32 %v214, 0.0
    %s223 = sadd.s32 %s15, 1
    %s224 = scalar_lea.vmem %s1, %s223
    %v225 = vld [vmem:[%s224] sm:$0xff]
    %v226 = vld [vmem:[%s224 + $0x10] sm:$0xff]
    %v227 = vld [vmem:[%s224 + $0x20] sm:$0xff]
    %v228 = vld [vmem:[%s224 + $0x30] sm:$0xff]
    %v229 = vld [vmem:[%s224 + $0x40] sm:$0xff]
    %v230 = vld [vmem:[%s224 + $0x50] sm:$0xff]
    %v231 = vld [vmem:[%s224 + $0x60] sm:$0xff]
    %v232 = vld [vmem:[%s224 + $0x70] sm:$0xff]
    %233 = vset.pattern.permute.xlu0 1
    %234 = vperm.xlu0 %233, %v150
    %v235 = vpop.permute.xlu0 %234
    %237 = vset.pattern.permute.xlu0 1
    %238 = vperm.xlu0 %237, %v151
    %v239 = vpop.permute.xlu0 %238
    %241 = vset.pattern.permute.xlu0 1
    %242 = vperm.xlu0 %241, %v152
    %v243 = vpop.permute.xlu0 %242
    %245 = vset.pattern.permute.xlu0 1
    %246 = vperm.xlu0 %245, %v153
    %v247 = vpop.permute.xlu0 %246
    %249 = vset.pattern.permute.xlu0 1
    %250 = vperm.xlu0 %249, %v154
    %v251 = vpop.permute.xlu0 %250
    %253 = vset.pattern.permute.xlu0 1
    %254 = vperm.xlu0 %253, %v155
    %v255 = vpop.permute.xlu0 %254
    %257 = vset.pattern.permute.xlu0 1
    %258 = vperm.xlu0 %257, %v156
    %v259 = vpop.permute.xlu0 %258
    %261 = vset.pattern.permute.xlu0 1
    %262 = vperm.xlu0 %261, %v157
    %v263 = vpop.permute.xlu0 %262
    %v265 = vmul.f32 %v235, %v225
    %v266 = vmul.f32 %v239, %v226
    %v267 = vmul.f32 %v243, %v227
    %v268 = vmul.f32 %v247, %v228
    %v269 = vmul.f32 %v251, %v229
    %v270 = vmul.f32 %v255, %v230
    %v271 = vmul.f32 %v259, %v231
    %v272 = vmul.f32 %v263, %v232
    %v273 = vadd.f32 %v215, %v265
    %v274 = vadd.f32 %v216, %v266
    %v275 = vadd.f32 %v217, %v267
    %v276 = vadd.f32 %v218, %v268
    %v277 = vadd.f32 %v219, %v269
    %v278 = vadd.f32 %v220, %v270
    %v279 = vadd.f32 %v221, %v271
    %v280 = vadd.f32 %v222, %v272
    %s281 = sadd.s32 %s15, 2
    %s282 = scalar_lea.vmem %s1, %s281
    %v283 = vld [vmem:[%s282] sm:$0xff]
    %v284 = vld [vmem:[%s282 + $0x10] sm:$0xff]
    %v285 = vld [vmem:[%s282 + $0x20] sm:$0xff]
    %v286 = vld [vmem:[%s282 + $0x30] sm:$0xff]
    %v287 = vld [vmem:[%s282 + $0x40] sm:$0xff]
    %v288 = vld [vmem:[%s282 + $0x50] sm:$0xff]
    %v289 = vld [vmem:[%s282 + $0x60] sm:$0xff]
    %v290 = vld [vmem:[%s282 + $0x70] sm:$0xff]
    %291 = vset.pattern.permute.xlu0 2
    %292 = vperm.xlu0 %291, %v150
    %v293 = vpop.permute.xlu0 %292
    %295 = vset.pattern.permute.xlu0 2
    %296 = vperm.xlu0 %295, %v151
    %v297 = vpop.permute.xlu0 %296
    %299 = vset.pattern.permute.xlu0 2
    %300 = vperm.xlu0 %299, %v152
    %v301 = vpop.permute.xlu0 %300
    %303 = vset.pattern.permute.xlu0 2
    %304 = vperm.xlu0 %303, %v153
    %v305 = vpop.permute.xlu0 %304
    %307 = vset.pattern.permute.xlu0 2
    %308 = vperm.xlu0 %307, %v154
    %v309 = vpop.permute.xlu0 %308
    %311 = vset.pattern.permute.xlu0 2
    %312 = vperm.xlu0 %311, %v155
    %v313 = vpop.permute.xlu0 %312
    %315 = vset.pattern.permute.xlu0 2
    %316 = vperm.xlu0 %315, %v156
    %v317 = vpop.permute.xlu0 %316
    %319 = vset.pattern.permute.xlu0 2
    %320 = vperm.xlu0 %319, %v157
    %v321 = vpop.permute.xlu0 %320
    %v323 = vmul.f32 %v293, %v283
    %v324 = vmul.f32 %v297, %v284
    %v325 = vmul.f32 %v301, %v285
    %v326 = vmul.f32 %v305, %v286
    %v327 = vmul.f32 %v309, %v287
    %v328 = vmul.f32 %v313, %v288
    %v329 = vmul.f32 %v317, %v289
    %v330 = vmul.f32 %v321, %v290
    %v331 = vadd.f32 %v273, %v323
    %v332 = vadd.f32 %v274, %v324
    %v333 = vadd.f32 %v275, %v325
    %v334 = vadd.f32 %v276, %v326
    %v335 = vadd.f32 %v277, %v327
    %v336 = vadd.f32 %v278, %v328
    %v337 = vadd.f32 %v279, %v329
    %v338 = vadd.f32 %v280, %v330
    %vm339 = vcmask 64512
    %340 = vst.msk [vmem:[#allocation2] sm:$0xff] %vm339, %v331
    %341 = vst.msk [vmem:[#allocation2 + $0x8] sm:$0xff] %vm339, %v332
    %342 = vst.msk [vmem:[#allocation2 + $0x10] sm:$0xff] %vm339, %v333
    %343 = vst.msk [vmem:[#allocation2 + $0x18] sm:$0xff] %vm339, %v334
    %344 = vst.msk [vmem:[#allocation2 + $0x20] sm:$0xff] %vm339, %v335
    %345 = vst.msk [vmem:[#allocation2 + $0x28] sm:$0xff] %vm339, %v336
    %346 = vst.msk [vmem:[#allocation2 + $0x30] sm:$0xff] %vm339, %v337
    %347 = vst.msk [vmem:[#allocation2 + $0x38] sm:$0xff] %vm339, %v338
    %v348 = vsub.s32 %v27, %v29
    %v349 = vadd.s32 %v348, 1
    %vm350 = vcmp.eq.s32.totalorder %v349, 0
    %v351 = vsel %vm350, 1, 0
    %vm352 = vcmp.eq.s32.totalorder %v351, 1
    %v353 = vsel %vm352, %v170, 0.0
    %v354 = vsel %vm352, %v175, 0.0
    %v355 = vsel %vm352, %v180, 0.0
    %v356 = vsel %vm352, %v185, 0.0
    %v357 = vsel %vm352, %v190, 0.0
    %v358 = vsel %vm352, %v195, 0.0
    %v359 = vsel %vm352, %v200, 0.0
    %v360 = vsel %vm352, %v205, 0.0
    %vm361 = vcmp.eq.s32.totalorder %v349, 1
    %v362 = vsel %vm361, 1, 0
    %vm363 = vcmp.eq.s32.totalorder %v362, 1
    %v364 = vsel %vm363, %v235, %v353
    %v365 = vsel %vm363, %v239, %v354
    %v366 = vsel %vm363, %v243, %v355
    %v367 = vsel %vm363, %v247, %v356
    %v368 = vsel %vm363, %v251, %v357
    %v369 = vsel %vm363, %v255, %v358
    %v370 = vsel %vm363, %v259, %v359
    %v371 = vsel %vm363, %v263, %v360
    %vm372 = vcmp.eq.s32.totalorder %v349, 2
    %v373 = vsel %vm372, 1, 0
    %vm374 = vcmp.eq.s32.totalorder %v373, 1
    %v375 = vsel %vm374, %v293, %v364
    %v376 = vsel %vm374, %v297, %v365
    %v377 = vsel %vm374, %v301, %v366
    %v378 = vsel %vm374, %v305, %v367
    %v379 = vsel %vm374, %v309, %v368
    %v380 = vsel %vm374, %v313, %v369
    %v381 = vsel %vm374, %v317, %v370
    %v382 = vsel %vm374, %v321, %v371
    %383 = vst.msk [vmem:[#allocation4] sm:$0xff] %vm339, %v375
    %384 = vst.msk [vmem:[#allocation4 + $0x8] sm:$0xff] %vm339, %v376
    %385 = vst.msk [vmem:[#allocation4 + $0x10] sm:$0xff] %vm339, %v377
    %386 = vst.msk [vmem:[#allocation4 + $0x18] sm:$0xff] %vm339, %v378
    %387 = vst.msk [vmem:[#allocation4 + $0x20] sm:$0xff] %vm339, %v379
    %388 = vst.msk [vmem:[#allocation4 + $0x28] sm:$0xff] %vm339, %v380
    %389 = vst.msk [vmem:[#allocation4 + $0x30] sm:$0xff] %vm339, %v381
    %390 = vst.msk [vmem:[#allocation4 + $0x38] sm:$0xff] %vm339, %v382
    // Predicated region
    $region10: #{tpu_custom_call.1} parent=1 // pred_check
      _
    $region11: #{tpu_custom_call.1} parent=1 // pred_check_branch
      %392 = sbr.rel (0) target = $region13
    $region12: #{tpu_custom_call.1} parent=1 // pred_region
      %394 = vsyncadd [#allocation3], 0
      %s395 = sshll.u32 [#allocation2], 4
      %s396 = int_to_ptr.vmem [resolvable:$true] %s395
      %s397 = sshll.u32 %s2, 4
      %s398 = int_to_ptr.hbm [resolvable:$true] %s397
      %403 = dma.vmem_to_hbm [thread:$0]  %s396, 1024, %s398, [#allocation3], 128, 128, 8
    $region13: #{tpu_custom_call.1} parent=1 // pred_fallthru
      _
    // Predicated region
    $region14: #{tpu_custom_call.1} parent=1 // pred_check
      _
    $region15: #{tpu_custom_call.1} parent=1 // pred_check_branch
      %405 = sbr.rel (0) target = $region17
    $region16: #{tpu_custom_call.1} parent=1 // pred_region
      %407 = vsyncadd [#allocation5], 0
      %s408 = sshll.u32 [#allocation4], 4
      %s409 = int_to_ptr.vmem [resolvable:$true] %s408
      %s410 = sshll.u32 %s3, 4
      %s411 = int_to_ptr.hbm [resolvable:$true] %s410
      %416 = dma.vmem_to_hbm [thread:$0]  %s409, 1024, %s411, [#allocation5], 128, 128, 8
    $region17: #{tpu_custom_call.1} parent=1 // pred_fallthru
      _
    // Predicated region
    $region18: #{tpu_custom_call.1} parent=1 // pred_check
      _
    $region19: #{tpu_custom_call.1} parent=1 // pred_check_branch
      %418 = sbr.rel (0) target = $region21
    $region20: #{tpu_custom_call.1} parent=1 // pred_region
      %420 = dma.done [#allocation3], 1024
    $region21: #{tpu_custom_call.1} parent=1 // pred_fallthru
      _
    // Predicated region
    $region22: #{tpu_custom_call.1} parent=1 // pred_check
      _
    $region23: #{tpu_custom_call.1} parent=1 // pred_check_branch
      %422 = sbr.rel (0) target = $region25
    $region24: #{tpu_custom_call.1} parent=1 // pred_region
      %424 = dma.done [#allocation5], 1024
    $region25: #{tpu_custom_call.1} parent=1 // pred_fallthru
      _
    %425 = vsyncpa [#allocation3], 1
    %426 = vsyncpa [#allocation5], 1

</llo_original>
